<compile_context>
chip_gen: v7x
topology: tpu7x:2x2x1
jax: 0.10.0
libtpu: 0.0.40
codegen_flags: <defaults>
</compile_context>

<pallas_src>
import jax
import jax.numpy as jnp
from jax.experimental import pallas as pl
from jax.experimental.pallas import tpu as pltpu


def _ls_forward_kernel(x_ref, m_ref, inv_s_ref, o_ref):
    # x_ref:     (tile_n, p)     input rows
    # m_ref:     (1, K*p)        flattened location parameter
    # inv_s_ref: (1, K*p)        flattened exp(-log_s), precomputed in wrapper
    # o_ref:     (tile_n, K*p)   lane-dense output block
    x = x_ref[...]
    p = x.shape[-1]
    K = o_ref.shape[-1] // p
    # Replicate x K times along the lane axis so x_rep[:, k*p + j] = x[:, j].
    x_rep = jnp.tile(x, (1, K))
    o_ref[...] = ((x_rep - m_ref[...]) * inv_s_ref[...]).astype(o_ref.dtype)


def _choose_tile_n(N, K, p, *, block_budget_bytes=16 << 20, max_tile=2048):
    """Pick tile_n so double-buffered x + out blocks fit the VMEM budget."""
    # Dominant VMEM cost per row: 2 buffers * (x row + out row) * 4 bytes.
    per_row = 2 * (p + K * p) * 4
    t = block_budget_bytes // max(per_row, 1)
    t = max(8, min(int(t), max_tile))
    t = (t // 8) * 8                      # sublane (8) alignment
    n_rounded = ((N + 7) // 8) * 8        # never bigger than needed
    return max(8, min(t, n_rounded))


def location_scale_forward(x, m, log_s):
    """x: [..., p]; m, log_s: [K, p]  ->  [..., K, p] = (x - m) / exp(log_s)."""
    K, p = m.shape
    lead_shape = x.shape[:-1]
    assert x.shape[-1] == p
    N = 1
    for d in lead_shape:
        N *= d
    x2 = x.reshape(N, p)

    # One-time tiny [K, p] parameter prep (not per grid step, not data-sized):
    m_flat = m.reshape(1, K * p).astype(x.dtype)
    inv_s_flat = jnp.exp(-log_s).reshape(1, K * p).astype(x.dtype)

    tile_n = _choose_tile_n(N, K, p)
    grid = (pl.cdiv(N, tile_n),)

    out = pl.pallas_call(
        _ls_forward_kernel,
        out_shape=jax.ShapeDtypeStruct((N, K * p), x.dtype),
        grid_spec=pltpu.PrefetchScalarGridSpec(
            num_scalar_prefetch=0,
            grid=grid,
            in_specs=[
                pl.BlockSpec((tile_n, p), lambda i: (i, 0)),
                pl.BlockSpec((1, K * p), lambda i: (0, 0)),
                pl.BlockSpec((1, K * p), lambda i: (0, 0)),
            ],
            out_specs=pl.BlockSpec((tile_n, K * p), lambda i: (i, 0)),
        ),
        compiler_params=pltpu.CompilerParams(
            dimension_semantics=("parallel",),
            vmem_limit_bytes=64 << 20,
        ),
    )(x2, m_flat, inv_s_flat)

    return out.reshape(*lead_shape, K, p)


def location_scale_forward_ref(x, m, log_s):
    # Pure-JAX reference matching the PyTorch module exactly.
    X = jnp.expand_dims(x, -2)                    # [..., 1, p]
    return (X - m) / jnp.exp(log_s)               # [..., K, p]


if __name__ == "__main__":
    K, p = 8, 16
    batch, seq = 2, 8

    key = jax.random.PRNGKey(0)
    kx, km, ks = jax.random.split(key, 3)

    # Parameters mirroring nn.Parameter shapes: m ~ randn(K, p), log_s [K, p]
    # (small non-zero log_s to exercise the scale path).
    m = jax.random.normal(km, (K, p), dtype=jnp.float32)
    log_s = 0.1 * jax.random.normal(ks, (K, p), dtype=jnp.float32)

    # Input x of shape [batch, seq, p] (any leading dims are supported).
    x = jax.random.normal(kx, (batch, seq, p), dtype=jnp.float32)

    out = location_scale_forward(x, m, log_s)
    out = jax.block_until_ready(out)

    ref = location_scale_forward_ref(x, m, log_s)
    assert out.shape == (batch, seq, K, p), out.shape
    assert jnp.allclose(out, ref, atol=1e-5, rtol=1e-5), "mismatch vs reference"

    print("KERNEL_OK")
</pallas_src>

<mosaic_0001>
module attributes {stable_mosaic.version = 11 : i64} {
  func.func @_ls_forward_kernel(%arg0: i32, %arg1: memref<16x16xf32, #tpu.memory_space<vmem>>, %arg2: memref<1x128xf32, #tpu.memory_space<vmem>>, %arg3: memref<1x128xf32, #tpu.memory_space<vmem>>, %arg4: memref<16x128xf32, #tpu.memory_space<vmem>>) attributes {dimension_semantics = [#tpu.dimension_semantics<parallel>], iteration_bounds = array<i64: 1>, scalar_prefetch = 0 : i64, scratch_operands = 0 : i64, tpu.core_type = #tpu.core_type<tc>, window_params = [{transform_indices = @transform_0, window_bounds = array<i64: 16, 16>}, {pipeline_mode = #tpu.pipeline_mode<synchronous>, transform_indices = @transform_1, window_bounds = array<i64: 1, 128>}, {pipeline_mode = #tpu.pipeline_mode<synchronous>, transform_indices = @transform_2, window_bounds = array<i64: 1, 128>}, {transform_indices = @transform_3, window_bounds = array<i64: 16, 128>}]} {
    %c0 = arith.constant 0 : index
    %c0_0 = arith.constant 0 : index
    %0 = vector.load %arg1[%c0, %c0_0] : memref<16x16xf32, #tpu.memory_space<vmem>>, vector<16x16xf32>
    %1 = tpu.concatenate %0, %0, %0, %0, %0, %0, %0, %0 in 1 : vector<16x16xf32>, vector<16x16xf32>, vector<16x16xf32>, vector<16x16xf32>, vector<16x16xf32>, vector<16x16xf32>, vector<16x16xf32>, vector<16x16xf32> -> vector<16x128xf32>
    %c0_1 = arith.constant 0 : index
    %c0_2 = arith.constant 0 : index
    %2 = vector.load %arg2[%c0_1, %c0_2] : memref<1x128xf32, #tpu.memory_space<vmem>>, vector<1x128xf32>
    %3 = vector.broadcast %2 : vector<1x128xf32> to vector<16x128xf32>
    %4 = arith.subf %1, %3 : vector<16x128xf32>
    %c0_3 = arith.constant 0 : index
    %c0_4 = arith.constant 0 : index
    %5 = vector.load %arg3[%c0_3, %c0_4] : memref<1x128xf32, #tpu.memory_space<vmem>>, vector<1x128xf32>
    %6 = vector.broadcast %5 : vector<1x128xf32> to vector<16x128xf32>
    %7 = arith.mulf %4, %6 : vector<16x128xf32>
    %c0_5 = arith.constant 0 : index
    %c0_6 = arith.constant 0 : index
    %8 = vector.load %arg4[%c0_5, %c0_6] : memref<16x128xf32, #tpu.memory_space<vmem>>, vector<16x128xf32>
    tpu.vector_store %arg4[%c0_5, %c0_6], %7 {strides = array<i32>} : memref<16x128xf32, #tpu.memory_space<vmem>>, vector<16x128xf32>,
    return
  }
  func.func @transform_0(%arg0: i32) -> (i32, i32) {
    %c0_i32 = arith.constant 0 : i32
    %c0_i32_0 = arith.constant 0 : i32
    return %arg0, %c0_i32 : i32, i32
  }
  func.func @transform_1(%arg0: i32) -> (i32, i32) {
    %c0_i32 = arith.constant 0 : i32
    %c0_i32_0 = arith.constant 0 : i32
    %c0_i32_1 = arith.constant 0 : i32
    return %c0_i32, %c0_i32_0 : i32, i32
  }
  func.func @transform_2(%arg0: i32) -> (i32, i32) {
    %c0_i32 = arith.constant 0 : i32
    %c0_i32_0 = arith.constant 0 : i32
    %c0_i32_1 = arith.constant 0 : i32
    return %c0_i32, %c0_i32_0 : i32, i32
  }
  func.func @transform_3(%arg0: i32) -> (i32, i32) {
    %c0_i32 = arith.constant 0 : i32
    %c0_i32_0 = arith.constant 0 : i32
    return %arg0, %c0_i32 : i32, i32
  }
}

</mosaic_0001>

<llo_original>
// kernel: tpu_custom_call.1
$region0: #{tpu_custom_call.1}
  #allocation0 [shape = 'u32[]', space=smem, size = 0x4, offset = 0x4, fixed_abs, tag = 'smem constant byte address 0x4 - core index']
  #allocation1 [shape = 'u32[144,128]{1,0:T(1,128)}', space=vmem, size = 0x12000, scoped, tag = 'internal scratch']
  %s0 = inlined_call_operand.hbm [shape: f32[16,16], index: 0, kind: input, shape index: {}]
  %s1 = inlined_call_operand.hbm [shape: f32[1,128], index: 1, kind: input, shape index: {}]
  %s2 = inlined_call_operand.hbm [shape: f32[1,128], index: 2, kind: input, shape index: {}]
  %s3 = inlined_call_operand.hbm [shape: f32[16,128], index: 3, kind: output, shape index: {}]
  %s4 = sld [smem:[#allocation0]]
  $region34: #{tpu_custom_call.1} parent=0
    _
  %s6 = ssub.s32 1, %s4
  %s7 = scalar_select 0, %s6, %s4
  $region1: #{tpu_custom_call.1} parent=0
    #allocation2 [shape = 'u8[8192]{0}', space=vmem, size = 0x2000, scoped, tag = 'input window, operand 0, single buffered']
    #allocation3 [shape = 's32[1]{0}', space=sflag, size = 0x4, scoped, tag = 'scoped memory for tpu_custom_call.1']
    #allocation4 [shape = 's32[1]{0}', space=sflag, size = 0x4, scoped, tag = 'scoped memory for tpu_custom_call.1']
    #allocation5 [shape = 'u8[512]{0}', space=vmem, size = 0x400, scoped, tag = 'input window, operand 1, single buffered']
    #allocation6 [shape = 's32[1]{0}', space=sflag, size = 0x4, scoped, tag = 'scoped memory for tpu_custom_call.1']
    #allocation7 [shape = 'u8[512]{0}', space=vmem, size = 0x400, scoped, tag = 'input window, operand 2, single buffered']
    #allocation8 [shape = 'u8[8192]{0}', space=vmem, size = 0x2000, scoped, tag = 'output window, operand 0, single buffered']
    %8 = vsyncpa [#allocation3], 0
    %9 = vsyncpa [#allocation6], 0
    %10 = vsyncpa [#allocation4], 0
    // Predicated region
    $region2: #{tpu_custom_call.1} parent=1 // pred_check
      _
    $region3: #{tpu_custom_call.1} parent=1 // pred_check_branch
      %12 = sbr.rel (0) target = $region5
    $region4: #{tpu_custom_call.1} parent=1 // pred_region
      %s14 = ssub.s32 256, 256
      %15 = vsyncadd [#allocation3], %s14
      %s16 = sshll.u32 [#allocation2], 4
      %s17 = int_to_ptr.vmem [resolvable:$true] %s16
      %22 = dma.hbm_to_vmem [thread:$0]  %s0, 256, %s17, [#allocation3], 128, 128, 8
    $region5: #{tpu_custom_call.1} parent=1 // pred_fallthru
      _
    // Predicated region
    $region6: #{tpu_custom_call.1} parent=1 // pred_check
      _
    $region7: #{tpu_custom_call.1} parent=1 // pred_check_branch
      %24 = sbr.rel (0) target = $region9
    $region8: #{tpu_custom_call.1} parent=1 // pred_region
      %s26 = ssub.s32 16, 16
      %27 = vsyncadd [#allocation6], %s26
      %s29 = sshll.u32 [#allocation5], 4
      %s30 = int_to_ptr.vmem [resolvable:$true] %s29
      %32 = dma.hbm_to_vmem [thread:$0]  %s1, 16, %s30, [#allocation6]
    $region9: #{tpu_custom_call.1} parent=1 // pred_fallthru
      _
    // Predicated region
    $region10: #{tpu_custom_call.1} parent=1 // pred_check
      _
    $region11: #{tpu_custom_call.1} parent=1 // pred_check_branch
      %34 = sbr.rel (0) target = $region13
    $region12: #{tpu_custom_call.1} parent=1 // pred_region
      %s36 = ssub.s32 16, 16
      %37 = vsyncadd [#allocation6], %s36
      %s39 = sshll.u32 [#allocation7], 4
      %s40 = int_to_ptr.vmem [resolvable:$true] %s39
      %42 = dma.hbm_to_vmem [thread:$0]  %s2, 16, %s40, [#allocation6]
    $region13: #{tpu_custom_call.1} parent=1 // pred_fallthru
      _
    // Predicated region
    $region14: #{tpu_custom_call.1} parent=1 // pred_check
      _
    $region15: #{tpu_custom_call.1} parent=1 // pred_check_branch
      %44 = sbr.rel (0) target = $region17
    $region16: #{tpu_custom_call.1} parent=1 // pred_region
      %45 = dma.done [#allocation3], 256
    $region17: #{tpu_custom_call.1} parent=1 // pred_fallthru
      _
    // Predicated region
    $region18: #{tpu_custom_call.1} parent=1 // pred_check
      _
    $region19: #{tpu_custom_call.1} parent=1 // pred_check_branch
      %47 = sbr.rel (0) target = $region21
    $region20: #{tpu_custom_call.1} parent=1 // pred_region
      %48 = dma.done [#allocation6], 16
    $region21: #{tpu_custom_call.1} parent=1 // pred_fallthru
      _
    // Predicated region
    $region22: #{tpu_custom_call.1} parent=1 // pred_check
      _
    $region23: #{tpu_custom_call.1} parent=1 // pred_check_branch
      %50 = sbr.rel (0) target = $region25
    $region24: #{tpu_custom_call.1} parent=1 // pred_region
      %51 = dma.done [#allocation6], 16
    $region25: #{tpu_custom_call.1} parent=1 // pred_fallthru
      _
    %v52 = vld [vmem:[#allocation2] sm:$0xff]
    %v53 = vld [vmem:[#allocation2 + $0x8] sm:$0xff]
    %56 = vrot.lane.b32.xlu0 %v52, 16
    %v57 = vpop.permute.xlu0 %56
    %58 = vrot.lane.b32.xlu0 %v53, 16
    %v59 = vpop.permute.xlu0 %58
    %62 = vrot.lane.b32.xlu0 %v52, 32
    %v63 = vpop.permute.xlu0 %62
    %64 = vrot.lane.b32.xlu0 %v53, 32
    %v65 = vpop.permute.xlu0 %64
    %68 = vrot.lane.b32.xlu0 %v52, 48
    %v69 = vpop.permute.xlu0 %68
    %70 = vrot.lane.b32.xlu0 %v53, 48
    %v71 = vpop.permute.xlu0 %70
    %74 = vrot.lane.b32.xlu0 %v52, 64
    %v75 = vpop.permute.xlu0 %74
    %76 = vrot.lane.b32.xlu0 %v53, 64
    %v77 = vpop.permute.xlu0 %76
    %80 = vrot.lane.b32.xlu0 %v52, 80
    %v81 = vpop.permute.xlu0 %80
    %82 = vrot.lane.b32.xlu0 %v53, 80
    %v83 = vpop.permute.xlu0 %82
    %86 = vrot.lane.b32.xlu0 %v52, 96
    %v87 = vpop.permute.xlu0 %86
    %88 = vrot.lane.b32.xlu0 %v53, 96
    %v89 = vpop.permute.xlu0 %88
    %92 = vrot.lane.b32.xlu0 %v52, 112
    %v93 = vpop.permute.xlu0 %92
    %94 = vrot.lane.b32.xlu0 %v53, 112
    %v95 = vpop.permute.xlu0 %94
    %vm98 = vcmask 130048
    %v99 = vsel %vm98, %v52, %v57
    %v100 = vsel %vm98, %v53, %v59
    %vm101 = vcmask 261120
    %v102 = vsel %vm101, %v99, %v63
    %v103 = vsel %vm101, %v100, %v65
    %vm104 = vcmask 392192
    %v105 = vsel %vm104, %v102, %v69
    %v106 = vsel %vm104, %v103, %v71
    %vm107 = vcmask 523264
    %v108 = vsel %vm107, %v105, %v75
    %v109 = vsel %vm107, %v106, %v77
    %vm110 = vcmask 654336
    %v111 = vsel %vm110, %v108, %v81
    %v112 = vsel %vm110, %v109, %v83
    %vm113 = vcmask 785408
    %v114 = vsel %vm113, %v111, %v87
    %v115 = vsel %vm113, %v112, %v89
    %vm116 = vcmask 916480
    %v117 = vsel %vm116, %v114, %v93
    %v118 = vsel %vm116, %v115, %v95
    %v119 = vld [vmem:[#allocation5] sm:$0x1]
    %v121 = vlaneseq
    %v122 = vshrl.u32 %v121, 7
    %v123 = vsub.s32 0, %v122
    %v124 = vrot.slane %v119, %v123
    %v126 = vsub.f32 %v117, %v124
    %v127 = vsub.f32 %v118, %v124
    %v128 = vld [vmem:[#allocation7] sm:$0x1]
    %v130 = vlaneseq
    %v131 = vshrl.u32 %v130, 7
    %v132 = vsub.s32 0, %v131
    %v133 = vrot.slane %v128, %v132
    %v135 = vmul.f32 %v126, %v133
    %v136 = vmul.f32 %v127, %v133
    %137 = vst [vmem:[#allocation8] sm:$0xff] %v135
    %138 = vst [vmem:[#allocation8 + $0x8] sm:$0xff] %v136
    // Predicated region
    $region26: #{tpu_custom_call.1} parent=1 // pred_check
      _
    $region27: #{tpu_custom_call.1} parent=1 // pred_check_branch
      %140 = sbr.rel (0) target = $region29
    $region28: #{tpu_custom_call.1} parent=1 // pred_region
      %s142 = ssub.s32 256, 256
      %143 = vsyncadd [#allocation4], %s142
      %s144 = sshll.u32 [#allocation8], 4
      %s145 = int_to_ptr.vmem [resolvable:$true] %s144
      %150 = dma.vmem_to_hbm [thread:$0]  %s145, 256, %s3, [#allocation4], 128, 128, 8
    $region29: #{tpu_custom_call.1} parent=1 // pred_fallthru
      _
    // Predicated region
    $region30: #{tpu_custom_call.1} parent=1 // pred_check
      _
    $region31: #{tpu_custom_call.1} parent=1 // pred_check_branch
      %152 = sbr.rel (0) target = $region33
    $region32: #{tpu_custom_call.1} parent=1 // pred_region
      %153 = dma.done [#allocation4], 256
    $region33: #{tpu_custom_call.1} parent=1 // pred_fallthru
      _
    %154 = vsyncpa [#allocation3], 1
    %155 = vsyncpa [#allocation6], 1
    %156 = vsyncpa [#allocation4], 1

</llo_original>
